<compile_context>
chip_gen: v7x
topology: tpu7x:2x2x1
jax: 0.10.0
libtpu: 0.0.40
codegen_flags: <defaults>
</compile_context>

<pallas_src>
import functools

import jax
import jax.numpy as jnp
from jax import lax
from jax.experimental import pallas as pl
from jax.experimental.pallas import tpu as pltpu


def _round_up(x, m):
    return ((x + m - 1) // m) * m


def _clip_cos_diff_kernel(stu_ref, tea_ref, neg_ref, pos_ref, *,
                          n, tr, tc, mask_rows, mask_cols):
    i = pl.program_id(0)          # row-tile index   ("parallel")
    j = pl.program_id(1)          # col-tile index   (reduction axis, last)
    ni = pl.num_programs(0)
    nj = pl.num_programs(1)

    # Output blocks are resident across the column (reduction) axis.
    @pl.when(j == 0)
    def _init():
        neg_ref[...] = jnp.zeros_like(neg_ref)
        pos_ref[...] = jnp.zeros_like(pos_ref)

    # Cast per tile inside VMEM (inputs stream from HBM in their native dtype).
    stu = stu_ref[...].astype(jnp.float32)
    tea = tea_ref[...].astype(jnp.float32)
    diff = stu - tea
    neg = jnp.maximum(diff, 0.0)            # relu(stu - tea), raw (unweighted)

    row0 = i * tr
    col0 = j * tc
    # Does this tile intersect the main diagonal?
    has_diag = (row0 < col0 + tc) & (col0 < row0 + tr)

    # Tiles that need any masking: diagonal tiles, plus (only when N does not
    # divide the tile — static decision) the last row / column tile band.
    needs_slow = has_diag
    if mask_rows:
        needs_slow = needs_slow | (i == ni - 1)
    if mask_cols:
        needs_slow = needs_slow | (j == nj - 1)

    @pl.when(jnp.logical_not(needs_slow))
    def _fast():
        # Interior off-diagonal tile: unmasked sublane-only reduce.
        # No iotas, no weights, no cross-lane relayout.
        neg_ref[...] += jnp.sum(neg, axis=0).reshape(1, 1, tc)

    @pl.when(needs_slow)
    def _slow():
        lr = lax.broadcasted_iota(jnp.int32, (tr, tc), 0) + row0
        lc = lax.broadcasted_iota(jnp.int32, (tr, tc), 1) + col0
        is_diag = lr == lc
        neg_ok = jnp.logical_not(is_diag)
        pos_ok = is_diag
        if mask_rows or mask_cols:
            # Mask padding BEFORE reducing so edge-tile garbage (possibly
            # NaN/Inf) can never leak into the accumulators.
            in_bounds = (lr < n) & (lc < n)
            neg_ok = neg_ok & in_bounds
            pos_ok = pos_ok & in_bounds
        neg_ref[...] += jnp.sum(
            jnp.where(neg_ok, neg, 0.0), axis=0).reshape(1, 1, tc)
        # relu(tea - stu) = relu(-diff) = relu(diff) - diff
        pos = neg - diff
        pos_ref[...] += jnp.sum(
            jnp.where(pos_ok, pos, 0.0), axis=0).reshape(1, 1, tc)


def clip_cos_diff(stu_logits, tea_logits, *, row_tile=256, col_tile=2048):
    """Pallas implementation of CLIPCosDiff.forward. Returns a scalar f32."""
    assert stu_logits.shape == tea_logits.shape
    n, m = stu_logits.shape
    assert n == m, "logits must be square (N, N)"

    if n < 2:
        # Off-diagonal set is empty: torch.mean(empty) == NaN; reproduce that.
        d = (jnp.diagonal(tea_logits).astype(jnp.float32)
             - jnp.diagonal(stu_logits).astype(jnp.float32))
        return jnp.mean(jax.nn.relu(d)) + jnp.float32(jnp.nan)

    itemsize = jnp.dtype(stu_logits.dtype).itemsize
    sub = max(8, 32 // max(1, itemsize))      # sublane multiple for the dtype

    # Lane-wide rectangular tiles: wide last dim -> long contiguous DMA
    # segments per row; in-kernel reduction is sublane-only.
    tc = _round_up(min(int(col_tile), _round_up(n, 128)), 128)
    tr = min(int(row_tile), _round_up(n, sub))
    if n >= 2 * sub:
        # v7x megacore: give the "parallel" row axis at least two tiles.
        tr = min(tr, _round_up(pl.cdiv(n, 2), sub))
    tr = _round_up(tr, sub)

    g_rows = pl.cdiv(n, tr)
    g_cols = pl.cdiv(n, tc)
    mask_rows = (n % tr) != 0
    mask_cols = (n % tc) != 0

    kernel = functools.partial(
        _clip_cos_diff_kernel, n=n, tr=tr, tc=tc,
        mask_rows=mask_rows, mask_cols=mask_cols)

    neg_p, pos_p = pl.pallas_call(
        kernel,
        out_shape=(
            jax.ShapeDtypeStruct((g_rows, 1, tc), jnp.float32),
            jax.ShapeDtypeStruct((g_rows, 1, tc), jnp.float32),
        ),
        grid=(g_rows, g_cols),
        in_specs=[
            pl.BlockSpec((tr, tc), lambda i, j: (i, j)),
            pl.BlockSpec((tr, tc), lambda i, j: (i, j)),
        ],
        out_specs=(
            pl.BlockSpec((1, 1, tc), lambda i, j: (i, 0, 0)),
            pl.BlockSpec((1, 1, tc), lambda i, j: (i, 0, 0)),
        ),
        compiler_params=pltpu.CompilerParams(
            dimension_semantics=("parallel", "arbitrary"),
        ),
        cost_estimate=pl.CostEstimate(
            flops=3 * n * n,
            transcendentals=0,
            bytes_accessed=2 * n * n * itemsize + 2 * g_rows * tc * 4,
        ),
    )(stu_logits, tea_logits)

    # Raw partial sums -> finish the cross-lane reduction in XLA and apply the
    # two mean weights once (mean-after-sum, matching the reference).
    neg_sum = jnp.sum(neg_p)
    pos_sum = jnp.sum(pos_p)
    return neg_sum / jnp.float32(n * (n - 1)) + pos_sum / jnp.float32(n)


def _reference(stu, tea):
    # Pure-JAX reference mirroring the PyTorch code.
    n = stu.shape[0]
    stu = stu.astype(jnp.float32)
    tea = tea.astype(jnp.float32)
    pos_loss = jnp.mean(jax.nn.relu(jnp.diagonal(tea) - jnp.diagonal(stu)))

    def get_neg_element(x):
        return x.flatten()[:-1].reshape(n - 1, n + 1)[:, 1:].flatten()

    neg_loss = jnp.mean(jax.nn.relu(get_neg_element(stu) - get_neg_element(tea)))
    return neg_loss + pos_loss


if __name__ == "__main__":
    key = jax.random.PRNGKey(0)

    # (N, tile kwargs) cases:
    #  - N=8, defaults:            single padded tile (edge-mask path)
    #  - N=300, (128, 256) tiles:  3x2 grid -> diag tiles, edge tiles, masking
    #  - N=384, (128, 128) tiles:  3x3 grid, exact fit -> unmasked fast path
    checks = [
        (8, dict()),
        (300, dict(row_tile=128, col_tile=256)),
        (384, dict(row_tile=128, col_tile=128)),
    ]
    for n, kw in checks:
        k1, k2 = jax.random.split(jax.random.fold_in(key, n))
        stu_logits = jax.random.normal(k1, (n, n), dtype=jnp.float32)
        tea_logits = jax.random.normal(k2, (n, n), dtype=jnp.float32)

        out = jax.block_until_ready(clip_cos_diff(stu_logits, tea_logits, **kw))
        ref = jax.block_until_ready(_reference(stu_logits, tea_logits))
        assert jnp.allclose(out, ref, atol=1e-5, rtol=1e-5), (n, out, ref)

    print("KERNEL_OK")
</pallas_src>

<mosaic_0001>
module attributes {stable_mosaic.version = 11 : i64} {
  func.func @_clip_cos_diff_kernel(%arg0: i32, %arg1: i32, %arg2: memref<8x128xf32, #tpu.memory_space<vmem>>, %arg3: memref<8x128xf32, #tpu.memory_space<vmem>>, %arg4: memref<1x1x128xf32, #tpu.memory_space<vmem>>, %arg5: memref<1x1x128xf32, #tpu.memory_space<vmem>>) attributes {dimension_semantics = [#tpu.dimension_semantics<parallel>, #tpu.dimension_semantics<arbitrary>], iteration_bounds = array<i64: 1, 1>, scalar_prefetch = 0 : i64, scratch_operands = 0 : i64, tpu.core_type = #tpu.core_type<tc>, window_params = [{transform_indices = @transform_0, window_bounds = array<i64: 8, 128>}, {transform_indices = @transform_1, window_bounds = array<i64: 8, 128>}, {transform_indices = @transform_2, window_bounds = array<i64: 1, 1, 128>}, {transform_indices = @transform_3, window_bounds = array<i64: 1, 1, 128>}]} {
    %c0_i32 = arith.constant 0 : i32
    %0 = arith.cmpi eq, %arg1, %c0_i32 : i32
    %1 = arith.extui %0 : i1 to i32
    %c0_i32_0 = arith.constant 0 : i32
    %2 = arith.cmpi ne, %1, %c0_i32_0 : i32
    scf.if %2 {
      %cst_9 = arith.constant 0.000000e+00 : f32
      %22 = vector.broadcast %cst_9 : f32 to vector<1x1x128xf32>
      %c0_10 = arith.constant 0 : index
      %c0_11 = arith.constant 0 : index
      %c0_12 = arith.constant 0 : index
      %23 = vector.load %arg4[%c0_10, %c0_11, %c0_12] : memref<1x1x128xf32, #tpu.memory_space<vmem>>, vector<1x1x128xf32>
      tpu.vector_store %arg4[%c0_10, %c0_11, %c0_12], %22 {strides = array<i32>} : memref<1x1x128xf32, #tpu.memory_space<vmem>>, vector<1x1x128xf32>,
      %cst_13 = arith.constant 0.000000e+00 : f32
      %24 = vector.broadcast %cst_13 : f32 to vector<1x1x128xf32>
      %c0_14 = arith.constant 0 : index
      %c0_15 = arith.constant 0 : index
      %c0_16 = arith.constant 0 : index
      %25 = vector.load %arg5[%c0_14, %c0_15, %c0_16] : memref<1x1x128xf32, #tpu.memory_space<vmem>>, vector<1x1x128xf32>
      tpu.vector_store %arg5[%c0_14, %c0_15, %c0_16], %24 {strides = array<i32>} : memref<1x1x128xf32, #tpu.memory_space<vmem>>, vector<1x1x128xf32>,
    } else {
    }
    %c0 = arith.constant 0 : index
    %c0_1 = arith.constant 0 : index
    %3 = vector.load %arg2[%c0, %c0_1] : memref<8x128xf32, #tpu.memory_space<vmem>>, vector<8x128xf32>
    %c0_2 = arith.constant 0 : index
    %c0_3 = arith.constant 0 : index
    %4 = vector.load %arg3[%c0_2, %c0_3] : memref<8x128xf32, #tpu.memory_space<vmem>>, vector<8x128xf32>
    %5 = arith.subf %3, %4 : vector<8x128xf32>
    %cst = arith.constant 0.000000e+00 : f32
    %6 = vector.broadcast %cst : f32 to vector<8x128xf32>
    %7 = arith.maximumf %5, %6 : vector<8x128xf32>
    %c8_i32 = arith.constant 8 : i32
    %8 = arith.muli %arg0, %c8_i32 : i32
    %c128_i32 = arith.constant 128 : i32
    %9 = arith.muli %arg1, %c128_i32 : i32
    %c128_i32_4 = arith.constant 128 : i32
    %10 = arith.addi %9, %c128_i32_4 : i32
    %11 = arith.cmpi slt, %8, %10 : i32
    %c8_i32_5 = arith.constant 8 : i32
    %12 = arith.addi %8, %c8_i32_5 : i32
    %13 = arith.cmpi slt, %9, %12 : i32
    %14 = arith.andi %11, %13 : i1
    %c0_i32_6 = arith.constant 0 : i32
    %15 = arith.cmpi eq, %arg1, %c0_i32_6 : i32
    %16 = arith.ori %14, %15 : i1
    %true = arith.constant true
    %17 = arith.xori %16, %true : i1
    %18 = arith.extui %17 : i1 to i32
    %c0_i32_7 = arith.constant 0 : i32
    %19 = arith.cmpi ne, %18, %c0_i32_7 : i32
    scf.if %19 {
      %c0_9 = arith.constant 0 : index
      %c0_10 = arith.constant 0 : index
      %c0_11 = arith.constant 0 : index
      %22 = vector.load %arg4[%c0_9, %c0_10, %c0_11] : memref<1x1x128xf32, #tpu.memory_space<vmem>>, vector<1x1x128xf32>
      %cst_12 = arith.constant dense<0.000000e+00> : vector<128xf32>
      %23 = vector.multi_reduction <add>, %7, %cst_12 [0] : vector<8x128xf32> to vector<128xf32>
      %24 = vector.shape_cast %23 : vector<128xf32> to vector<1x1x128xf32>
      %25 = arith.addf %22, %24 : vector<1x1x128xf32>
      %c0_13 = arith.constant 0 : index
      %c0_14 = arith.constant 0 : index
      %c0_15 = arith.constant 0 : index
      %26 = vector.load %arg4[%c0_13, %c0_14, %c0_15] : memref<1x1x128xf32, #tpu.memory_space<vmem>>, vector<1x1x128xf32>
      tpu.vector_store %arg4[%c0_13, %c0_14, %c0_15], %25 {strides = array<i32>} : memref<1x1x128xf32, #tpu.memory_space<vmem>>, vector<1x1x128xf32>,
    } else {
    }
    %20 = arith.extui %16 : i1 to i32
    %c0_i32_8 = arith.constant 0 : i32
    %21 = arith.cmpi ne, %20, %c0_i32_8 : i32
    scf.if %21 {
      %22 = tpu.iota {dimensions = array<i32: 0>} : vector<8x128xi32>
      %23 = vector.broadcast %8 : i32 to vector<8x128xi32>
      %24 = arith.addi %22, %23 : vector<8x128xi32>
      %25 = tpu.iota {dimensions = array<i32: 1>} : vector<8x128xi32>
      %26 = vector.broadcast %9 : i32 to vector<8x128xi32>
      %27 = arith.addi %25, %26 : vector<8x128xi32>
      %28 = arith.cmpi eq, %24, %27 : vector<8x128xi32>
      %cst_9 = arith.constant dense<true> : vector<8x128xi1>
      %29 = arith.xori %28, %cst_9 : vector<8x128xi1>
      %c8_i32_10 = arith.constant 8 : i32
      %30 = vector.broadcast %c8_i32_10 : i32 to vector<8x128xi32>
      %31 = arith.cmpi slt, %24, %30 : vector<8x128xi32>
      %c8_i32_11 = arith.constant 8 : i32
      %32 = vector.broadcast %c8_i32_11 : i32 to vector<8x128xi32>
      %33 = arith.cmpi slt, %27, %32 : vector<8x128xi32>
      %34 = arith.andi %31, %33 : vector<8x128xi1>
      %35 = arith.andi %29, %34 : vector<8x128xi1>
      %36 = arith.andi %28, %34 : vector<8x128xi1>
      %c0_12 = arith.constant 0 : index
      %c0_13 = arith.constant 0 : index
      %c0_14 = arith.constant 0 : index
      %37 = vector.load %arg4[%c0_12, %c0_13, %c0_14] : memref<1x1x128xf32, #tpu.memory_space<vmem>>, vector<1x1x128xf32>
      %cst_15 = arith.constant 0.000000e+00 : f32
      %38 = vector.broadcast %cst_15 : f32 to vector<8x128xf32>
      %39 = arith.select %35, %7, %38 : vector<8x128xi1>, vector<8x128xf32>
      %cst_16 = arith.constant dense<0.000000e+00> : vector<128xf32>
      %40 = vector.multi_reduction <add>, %39, %cst_16 [0] : vector<8x128xf32> to vector<128xf32>
      %41 = vector.shape_cast %40 : vector<128xf32> to vector<1x1x128xf32>
      %42 = arith.addf %37, %41 : vector<1x1x128xf32>
      %c0_17 = arith.constant 0 : index
      %c0_18 = arith.constant 0 : index
      %c0_19 = arith.constant 0 : index
      %43 = vector.load %arg4[%c0_17, %c0_18, %c0_19] : memref<1x1x128xf32, #tpu.memory_space<vmem>>, vector<1x1x128xf32>
      tpu.vector_store %arg4[%c0_17, %c0_18, %c0_19], %42 {strides = array<i32>} : memref<1x1x128xf32, #tpu.memory_space<vmem>>, vector<1x1x128xf32>,
      %44 = arith.subf %7, %5 : vector<8x128xf32>
      %c0_20 = arith.constant 0 : index
      %c0_21 = arith.constant 0 : index
      %c0_22 = arith.constant 0 : index
      %45 = vector.load %arg5[%c0_20, %c0_21, %c0_22] : memref<1x1x128xf32, #tpu.memory_space<vmem>>, vector<1x1x128xf32>
      %cst_23 = arith.constant 0.000000e+00 : f32
      %46 = vector.broadcast %cst_23 : f32 to vector<8x128xf32>
      %47 = arith.select %36, %44, %46 : vector<8x128xi1>, vector<8x128xf32>
      %cst_24 = arith.constant dense<0.000000e+00> : vector<128xf32>
      %48 = vector.multi_reduction <add>, %47, %cst_24 [0] : vector<8x128xf32> to vector<128xf32>
      %49 = vector.shape_cast %48 : vector<128xf32> to vector<1x1x128xf32>
      %50 = arith.addf %45, %49 : vector<1x1x128xf32>
      %c0_25 = arith.constant 0 : index
      %c0_26 = arith.constant 0 : index
      %c0_27 = arith.constant 0 : index
      %51 = vector.load %arg5[%c0_25, %c0_26, %c0_27] : memref<1x1x128xf32, #tpu.memory_space<vmem>>, vector<1x1x128xf32>
      tpu.vector_store %arg5[%c0_25, %c0_26, %c0_27], %50 {strides = array<i32>} : memref<1x1x128xf32, #tpu.memory_space<vmem>>, vector<1x1x128xf32>,
    } else {
    }
    return
  }
  func.func @transform_0(%arg0: i32, %arg1: i32) -> (i32, i32) {
    %c0_i32 = arith.constant 0 : i32
    return %arg0, %arg1 : i32, i32
  }
  func.func @transform_1(%arg0: i32, %arg1: i32) -> (i32, i32) {
    %c0_i32 = arith.constant 0 : i32
    return %arg0, %arg1 : i32, i32
  }
  func.func @transform_2(%arg0: i32, %arg1: i32) -> (i32, i32, i32) {
    %c0_i32 = arith.constant 0 : i32
    %c0_i32_0 = arith.constant 0 : i32
    %c0_i32_1 = arith.constant 0 : i32
    return %arg0, %c0_i32, %c0_i32_0 : i32, i32, i32
  }
  func.func @transform_3(%arg0: i32, %arg1: i32) -> (i32, i32, i32) {
    %c0_i32 = arith.constant 0 : i32
    %c0_i32_0 = arith.constant 0 : i32
    %c0_i32_1 = arith.constant 0 : i32
    return %arg0, %c0_i32, %c0_i32_0 : i32, i32, i32
  }
}

</mosaic_0001>

<llo_original>
// kernel: tpu_custom_call.1
$region0: #{tpu_custom_call.1}
  #allocation0 [shape = 'u32[]', space=smem, size = 0x4, offset = 0x4, fixed_abs, tag = 'smem constant byte address 0x4 - core index']
  #allocation1 [shape = 'u32[144,128]{1,0:T(1,128)}', space=vmem, size = 0x12000, scoped, tag = 'internal scratch']
  %s0 = inlined_call_operand.hbm [shape: f32[8,8], index: 0, kind: input, shape index: {}]
  %s1 = inlined_call_operand.hbm [shape: f32[8,8], index: 1, kind: input, shape index: {}]
  %s2 = inlined_call_operand.hbm [shape: f32[1,1,128], index: 2, kind: output, shape index: {0}]
  %s3 = inlined_call_operand.hbm [shape: f32[1,1,128], index: 3, kind: output, shape index: {1}]
  %4 = xla_tuple %s2, %s3
  %s5 = sld [smem:[#allocation0]]
  $region46: #{tpu_custom_call.1} parent=0
    _
  %s7 = ssub.s32 1, %s5
  %s8 = scalar_select 0, %s7, %s5
  $region1: #{tpu_custom_call.1} parent=0
    #allocation2 [shape = 'u8[4096]{0}', space=vmem, size = 0x1000, scoped, tag = 'input window, operand 0, single buffered']
    #allocation3 [shape = 's32[1]{0}', space=sflag, size = 0x4, scoped, tag = 'scoped memory for tpu_custom_call.1']
    #allocation4 [shape = 's32[1]{0}', space=sflag, size = 0x4, scoped, tag = 'scoped memory for tpu_custom_call.1']
    #allocation5 [shape = 'u8[4096]{0}', space=vmem, size = 0x1000, scoped, tag = 'input window, operand 1, single buffered']
    #allocation6 [shape = 's32[1]{0}', space=sflag, size = 0x4, scoped, tag = 'scoped memory for tpu_custom_call.1']
    #allocation7 [shape = 'u8[512]{0}', space=vmem, size = 0x400, scoped, tag = 'output window, operand 0, single buffered']
    #allocation8 [shape = 'u8[512]{0}', space=vmem, size = 0x400, scoped, tag = 'output window, operand 1, single buffered']
    #allocation9 [shape = 's32[1]{0}', space=sflag, size = 0x4, scoped, tag = 'scoped memory for tpu_custom_call.1']
    %9 = vsyncpa [#allocation3], 0
    %10 = vsyncpa [#allocation6], 0
    %11 = vsyncpa [#allocation4], 0
    %12 = vsyncpa [#allocation9], 0
    // Predicated region
    $region2: #{tpu_custom_call.1} parent=1 // pred_check
      _
    $region3: #{tpu_custom_call.1} parent=1 // pred_check_branch
      %14 = sbr.rel (0) target = $region5
    $region4: #{tpu_custom_call.1} parent=1 // pred_region
      %s16 = ssub.s32 128, 128
      %17 = vsyncadd [#allocation3], %s16
      %s19 = sshll.u32 [#allocation2], 4
      %s20 = int_to_ptr.vmem [resolvable:$true] %s19
      %22 = dma.hbm_to_vmem [thread:$0]  %s0, 128, %s20, [#allocation3]
    $region5: #{tpu_custom_call.1} parent=1 // pred_fallthru
      _
    // Predicated region
    $region6: #{tpu_custom_call.1} parent=1 // pred_check
      _
    $region7: #{tpu_custom_call.1} parent=1 // pred_check_branch
      %24 = sbr.rel (0) target = $region9
    $region8: #{tpu_custom_call.1} parent=1 // pred_region
      %s26 = ssub.s32 128, 128
      %27 = vsyncadd [#allocation6], %s26
      %s29 = sshll.u32 [#allocation5], 4
      %s30 = int_to_ptr.vmem [resolvable:$true] %s29
      %32 = dma.hbm_to_vmem [thread:$0]  %s1, 128, %s30, [#allocation6]
    $region9: #{tpu_custom_call.1} parent=1 // pred_fallthru
      _
    // Predicated region
    $region10: #{tpu_custom_call.1} parent=1 // pred_check
      _
    $region11: #{tpu_custom_call.1} parent=1 // pred_check_branch
      %34 = sbr.rel (0) target = $region13
    $region12: #{tpu_custom_call.1} parent=1 // pred_region
      %35 = dma.done [#allocation3], 128
    $region13: #{tpu_custom_call.1} parent=1 // pred_fallthru
      _
    // Predicated region
    $region14: #{tpu_custom_call.1} parent=1 // pred_check
      _
    $region15: #{tpu_custom_call.1} parent=1 // pred_check_branch
      %37 = sbr.rel (0) target = $region17
    $region16: #{tpu_custom_call.1} parent=1 // pred_region
      %38 = dma.done [#allocation6], 128
    $region17: #{tpu_custom_call.1} parent=1 // pred_fallthru
      _
    %p39 = scmp.eq.s32.totalorder 0, 0
    // Predicated region
    $region18: #{tpu_custom_call.1} parent=1 // pred_check
      %p40 = pneg %p39
    $region19: #{tpu_custom_call.1} parent=1 // pred_check_branch
      %42 = sbr.rel (%p40) target = $region21
    $region20: #{tpu_custom_call.1} parent=1 // pred_region
      %43 = vst [vmem:[#allocation7] sm:$0x1] 0.0
      %44 = vst [vmem:[#allocation8] sm:$0x1] 0.0
    $region21: #{tpu_custom_call.1} parent=1 // pred_fallthru
      _
    %v45 = vld [vmem:[#allocation2] sm:$0xff]
    %v46 = vld [vmem:[#allocation5] sm:$0xff]
    %v47 = vsub.f32 %v45, %v46
    %v48 = vmax.f32 %v47, 0.0
    %s49 = smul.u32 0, 8
    %s50 = smul.u32 0, 128
    %s51 = sadd.s32 %s50, 128
    %p52 = scmp.lt.s32.totalorder %s49, %s51
    %s53 = sadd.s32 %s49, 8
    %p54 = scmp.lt.s32.totalorder %s50, %s53
    %p55 = pnand %p52, %p54
    %p56 = pneg %p55
    %p57 = por %p56, %p39
    // Predicated region
    $region22: #{tpu_custom_call.1} parent=1 // pred_check
      %p58 = pneg %p57
    $region23: #{tpu_custom_call.1} parent=1 // pred_check_branch
      %60 = sbr.rel (%p58) target = $region25
    $region24: #{tpu_custom_call.1} parent=1 // pred_region
      %v61 = vlaneseq
      %v62 = vshrl.u32 %v61, 7
      %v63 = vstv %s49
      %v64 = vadd.s32 %v62, %v63
      %v65 = vlaneseq
      %v66 = vand.u32 %v65, 127
      %v67 = vstv %s50
      %v68 = vadd.s32 %v66, %v67
      %vm69 = vcmp.eq.s32.totalorder %v64, %v68
      %vm70 = vmxor %vm69, 1
      %vm71 = vcmp.lt.s32.totalorder %v64, 8
      %vm72 = vcmp.lt.s32.totalorder %v68, 8
      %vm73 = vmand %vm71, %vm72
      %vm74 = vmand %vm70, %vm73
      %vm75 = vmand %vm69, %vm73
      %v76 = vld [vmem:[#allocation7] sm:$0x1]
      %v77 = vsel %vm74, %v48, 0.0
      %v78 = vrot.slane %v77, 4
      %v79 = vadd.f32 %v77, %v78
      %v80 = vrot.slane %v79, 2
      %v81 = vadd.f32 %v79, %v80
      %v82 = vrot.slane %v81, 1
      %v83 = vadd.f32 %v81, %v82
      %v84 = vadd.f32 %v76, %v83
      %85 = vst [vmem:[#allocation7] sm:$0x1] %v84
      %v86 = vsub.f32 %v48, %v47
      %v87 = vld [vmem:[#allocation8] sm:$0x1]
      %v88 = vsel %vm75, %v86, 0.0
      %v89 = vrot.slane %v88, 4
      %v90 = vadd.f32 %v88, %v89
      %v91 = vrot.slane %v90, 2
      %v92 = vadd.f32 %v90, %v91
      %v93 = vrot.slane %v92, 1
      %v94 = vadd.f32 %v92, %v93
      %v95 = vadd.f32 %v87, %v94
      %96 = vst [vmem:[#allocation8] sm:$0x1] %v95
    $region25: #{tpu_custom_call.1} parent=1 // pred_fallthru
      _
    %p97 = pneg %p57
    // Predicated region
    $region26: #{tpu_custom_call.1} parent=1 // pred_check
      _
    $region27: #{tpu_custom_call.1} parent=1 // pred_check_branch
      %99 = sbr.rel (%p57) target = $region29
    $region28: #{tpu_custom_call.1} parent=1 // pred_region
      %v100 = vld [vmem:[#allocation7] sm:$0x1]
      %v101 = vrot.slane %v48, 4
      %v102 = vadd.f32 %v48, %v101
      %v103 = vrot.slane %v102, 2
      %v104 = vadd.f32 %v102, %v103
      %v105 = vrot.slane %v104, 1
      %v106 = vadd.f32 %v104, %v105
      %v107 = vadd.f32 %v100, %v106
      %108 = vst [vmem:[#allocation7] sm:$0x1] %v107
    $region29: #{tpu_custom_call.1} parent=1 // pred_fallthru
      _
    // Predicated region
    $region30: #{tpu_custom_call.1} parent=1 // pred_check
      _
    $region31: #{tpu_custom_call.1} parent=1 // pred_check_branch
      %110 = sbr.rel (0) target = $region33
    $region32: #{tpu_custom_call.1} parent=1 // pred_region
      %s112 = ssub.s32 16, 16
      %113 = vsyncadd [#allocation4], %s112
      %s115 = sshll.u32 [#allocation7], 4
      %s116 = int_to_ptr.vmem [resolvable:$true] %s115
      %118 = dma.vmem_to_hbm [thread:$0]  %s116, 16, %s2, [#allocation4]
    $region33: #{tpu_custom_call.1} parent=1 // pred_fallthru
      _
    // Predicated region
    $region34: #{tpu_custom_call.1} parent=1 // pred_check
      _
    $region35: #{tpu_custom_call.1} parent=1 // pred_check_branch
      %120 = sbr.rel (0) target = $region37
    $region36: #{tpu_custom_call.1} parent=1 // pred_region
      %s122 = ssub.s32 16, 16
      %123 = vsyncadd [#allocation9], %s122
      %s125 = sshll.u32 [#allocation8], 4
      %s126 = int_to_ptr.vmem [resolvable:$true] %s125
      %128 = dma.vmem_to_hbm [thread:$0]  %s126, 16, %s3, [#allocation9]
    $region37: #{tpu_custom_call.1} parent=1 // pred_fallthru
      _
    // Predicated region
    $region38: #{tpu_custom_call.1} parent=1 // pred_check
      _
    $region39: #{tpu_custom_call.1} parent=1 // pred_check_branch
      %130 = sbr.rel (0) target = $region41
    $region40: #{tpu_custom_call.1} parent=1 // pred_region
      %131 = dma.done [#allocation4], 16
    $region41: #{tpu_custom_call.1} parent=1 // pred_fallthru
      _
    // Predicated region
    $region42: #{tpu_custom_call.1} parent=1 // pred_check
      _
    $region43: #{tpu_custom_call.1} parent=1 // pred_check_branch
      %133 = sbr.rel (0) target = $region45
    $region44: #{tpu_custom_call.1} parent=1 // pred_region
      %134 = dma.done [#allocation9], 16
    $region45: #{tpu_custom_call.1} parent=1 // pred_fallthru
      _
    %135 = vsyncpa [#allocation3], 1
    %136 = vsyncpa [#allocation6], 1
    %137 = vsyncpa [#allocation4], 1
    %138 = vsyncpa [#allocation9], 1

</llo_original>
